<compile_context>
chip_gen: v7x
topology: tpu7x:2x2x1
jax: 0.10.0
libtpu: 0.0.40
codegen_flags: <defaults>
</compile_context>

<pallas_src>
import functools

import jax
import jax.numpy as jnp
from jax.experimental import pallas as pl
from jax.experimental.pallas import tpu as pltpu

LANES = 128


def _make_edges(bins):
    edges = [float(x) / bins for x in range(bins + 1)]
    edges[-1] += 1e-6
    return tuple(edges)


def _round_up(x, m):
    return (x + m - 1) // m * m


def ghmc_kernel(pred_ref, target_ref, lw_ref, loss_ref, s_acc, c_acc, *, edges, bins):
    step = pl.program_id(0)

    @pl.when(step == 0)
    def _init():
        s_acc[...] = jnp.zeros_like(s_acc)
        c_acc[...] = jnp.zeros_like(c_acc)

    pred = pred_ref[...].astype(jnp.float32)
    target = target_ref[...].astype(jnp.float32)
    lw = lw_ref[...].astype(jnp.float32)

    # Numerically stable BCE-with-logits FIRST so pred/target die before the bin loop
    # (cuts live vregs across the 10x unrolled loop below).
    bce = (jnp.maximum(pred, 0.0) - pred * target
           + jnp.log1p(jnp.exp(-jnp.abs(pred))))

    # g uses jax.nn.sigmoid to stay bit-compatible with the reference edge comparisons.
    g = jnp.abs(jax.nn.sigmoid(pred) - target)
    valid = lw > 0.0

    # Exact bin index with the module's edge semantics: count internal edges <= g.
    # (A floor(g*bins) formulation would be cheaper but can disagree at bin boundaries.)
    bin_id = jnp.zeros(g.shape, dtype=jnp.int32)
    for j in range(1, bins):
        bin_id = bin_id + (g >= edges[j]).astype(jnp.int32)
    # Invalid elements (incl. wrapper padding) -> sentinel bin `bins`, never matched below.
    bin_id = jnp.where(valid, bin_id, jnp.int32(bins))

    # Per-bin partials: one equality compare per bin, sublane-only (VPU add) reduction
    # here; the cross-lane reduction is deferred to the final grid step.
    for i in range(bins):
        m = (bin_id == i).astype(jnp.float32)
        c_acc[pl.ds(i, 1), :] += jnp.sum(m, axis=0, keepdims=True)
        s_acc[pl.ds(i, 1), :] += jnp.sum(bce * m, axis=0, keepdims=True)

    @pl.when(step == pl.num_programs(0) - 1)
    def _finalize():
        c = jnp.sum(c_acc[...], axis=1, keepdims=True)        # (bins_pad, 1)
        s = jnp.sum(s_acc[...], axis=1, keepdims=True)        # (bins_pad, 1)
        nonempty = (c > 0.0).astype(jnp.float32)
        n = jnp.sum(nonempty, keepdims=True)                  # (1, 1)
        per_bin = jnp.where(c > 0.0, s / jnp.maximum(c, 1.0), 0.0)
        loss = jnp.sum(per_bin, keepdims=True) / jnp.maximum(n, 1.0)   # (1, 1)
        loss_ref[...] = loss


def ghmc_loss(pred, target, label_weight, *, bins=10, loss_weight=1.0,
              block_rows=1024):
    """Pallas GHMC forward. pred/target/label_weight: same-shape arrays."""
    assert pred.shape == target.shape == label_weight.shape
    edges = _make_edges(bins)

    n_elem = int(pred.size)
    rows = max(1, (n_elem + LANES - 1) // LANES)
    br = min(block_rows, _round_up(rows, 8))      # block rows, multiple of 8 sublanes
    rows_pad = _round_up(rows, br)
    padded = rows_pad * LANES
    bins_pad = _round_up(max(bins, 8), 8)

    def _flat_pad(x):
        # Zero padding: finite pred keeps bce finite; label_weight=0 marks padding invalid.
        x = x.reshape(-1)
        if padded != n_elem:
            x = jnp.pad(x, (0, padded - n_elem))
        return x.reshape(rows_pad, LANES)

    p2 = _flat_pad(pred)
    t2 = _flat_pad(target)
    w2 = _flat_pad(label_weight)

    kernel = functools.partial(ghmc_kernel, edges=edges, bins=bins)
    out = pl.pallas_call(
        kernel,
        out_shape=jax.ShapeDtypeStruct((1, 1), jnp.float32),
        grid_spec=pltpu.PrefetchScalarGridSpec(
            num_scalar_prefetch=0,
            grid=(rows_pad // br,),
            in_specs=[pl.BlockSpec((br, LANES), lambda i: (i, 0))] * 3,
            out_specs=pl.BlockSpec((1, 1), lambda i: (0, 0)),
            scratch_shapes=[pltpu.VMEM((bins_pad, LANES), jnp.float32),   # S_i partials
                            pltpu.VMEM((bins_pad, LANES), jnp.float32)],  # c_i partials
        ),
        compiler_params=pltpu.CompilerParams(
            dimension_semantics=("arbitrary",)),
    )(p2, t2, w2)
    return out[0, 0] * jnp.float32(loss_weight)


def ghmc_ref(pred, target, label_weight, *, bins=10, loss_weight=1.0):
    """Pure-JAX reference mirroring the PyTorch module (momentum=0)."""
    edges = _make_edges(bins)
    pred = pred.astype(jnp.float32)
    target = target.astype(jnp.float32)
    lw = label_weight.astype(jnp.float32)
    g = jnp.abs(jax.nn.sigmoid(pred) - target)
    valid = lw > 0.0
    tot = jnp.maximum(jnp.sum(valid.astype(jnp.float32)), 1.0)
    weights = jnp.zeros_like(pred)
    n = jnp.float32(0.0)
    for i in range(bins):
        inds = (g >= edges[i]) & (g < edges[i + 1]) & valid
        num = jnp.sum(inds.astype(jnp.float32))
        has = num > 0.0
        weights = weights + inds.astype(jnp.float32) * jnp.where(
            has, tot / jnp.maximum(num, 1.0), 0.0)
        n = n + jnp.where(has, 1.0, 0.0)
    weights = weights / jnp.maximum(n, 1.0)
    bce = (jnp.maximum(pred, 0.0) - pred * target
           + jnp.log1p(jnp.exp(-jnp.abs(pred))))
    return (jnp.sum(bce * weights) / tot) * loss_weight


if __name__ == "__main__":
    key = jax.random.PRNGKey(0)

    # Test 1: module-sized input (single block).
    k1, k2, k3 = jax.random.split(key, 3)
    batch_num, class_num = 64, 8
    pred = jax.random.normal(k1, (batch_num, class_num), dtype=jnp.float32) * 2.0
    target = (jax.random.uniform(k2, (batch_num, class_num)) > 0.5).astype(jnp.float32)
    label_weight = (jax.random.uniform(k3, (batch_num, class_num)) > 0.1).astype(jnp.float32)

    loss = ghmc_loss(pred, target, label_weight, bins=10, loss_weight=1.0)
    loss = jax.block_until_ready(loss)
    ref = ghmc_ref(pred, target, label_weight, bins=10, loss_weight=1.0)
    assert jnp.allclose(loss, ref, rtol=1e-5, atol=1e-5), (loss, ref)

    # Test 2: force a multi-block grid (exercises the streaming accumulation path).
    k4, k5, k6 = jax.random.split(jax.random.PRNGKey(1), 3)
    b2, c2 = 256, 8                      # 2048 elems -> 16 rows; block_rows=8 -> grid=2
    pred2 = jax.random.normal(k4, (b2, c2), dtype=jnp.float32) * 2.0
    target2 = (jax.random.uniform(k5, (b2, c2)) > 0.5).astype(jnp.float32)
    lw2 = (jax.random.uniform(k6, (b2, c2)) > 0.1).astype(jnp.float32)

    loss2 = ghmc_loss(pred2, target2, lw2, bins=10, loss_weight=1.0, block_rows=8)
    loss2 = jax.block_until_ready(loss2)
    ref2 = ghmc_ref(pred2, target2, lw2, bins=10, loss_weight=1.0)
    assert jnp.allclose(loss2, ref2, rtol=1e-5, atol=1e-5), (loss2, ref2)

    print("KERNEL_OK")
</pallas_src>

<mosaic_0001>
module attributes {stable_mosaic.version = 11 : i64} {
  func.func @ghmc_kernel(%arg0: i32, %arg1: memref<8x128xf32, #tpu.memory_space<vmem>>, %arg2: memref<8x128xf32, #tpu.memory_space<vmem>>, %arg3: memref<8x128xf32, #tpu.memory_space<vmem>>, %arg4: memref<1x1xf32, #tpu.memory_space<vmem>>, %arg5: memref<16x128xf32, #tpu.memory_space<vmem>>, %arg6: memref<16x128xf32, #tpu.memory_space<vmem>>) attributes {dimension_semantics = [#tpu.dimension_semantics<arbitrary>], iteration_bounds = array<i64: 1>, scalar_prefetch = 0 : i64, scratch_operands = 2 : i64, tpu.core_type = #tpu.core_type<tc>, window_params = [{transform_indices = @transform_0, window_bounds = array<i64: 8, 128>}, {transform_indices = @transform_1, window_bounds = array<i64: 8, 128>}, {transform_indices = @transform_2, window_bounds = array<i64: 8, 128>}, {pipeline_mode = #tpu.pipeline_mode<synchronous>, transform_indices = @transform_3, window_bounds = array<i64: 1, 1>}]} {
    %c0_i32 = arith.constant 0 : i32
    %0 = arith.cmpi eq, %arg0, %c0_i32 : i32
    %1 = arith.extui %0 : i1 to i32
    %c0_i32_0 = arith.constant 0 : i32
    %2 = arith.cmpi ne, %1, %c0_i32_0 : i32
    scf.if %2 {
      %cst_113 = arith.constant 0.000000e+00 : f32
      %217 = vector.broadcast %cst_113 : f32 to vector<16x128xf32>
      %c0_114 = arith.constant 0 : index
      %c0_115 = arith.constant 0 : index
      %218 = vector.load %arg5[%c0_114, %c0_115] : memref<16x128xf32, #tpu.memory_space<vmem>>, vector<16x128xf32>
      tpu.vector_store %arg5[%c0_114, %c0_115], %217 {strides = array<i32>} : memref<16x128xf32, #tpu.memory_space<vmem>>, vector<16x128xf32>,
      %cst_116 = arith.constant 0.000000e+00 : f32
      %219 = vector.broadcast %cst_116 : f32 to vector<16x128xf32>
      %c0_117 = arith.constant 0 : index
      %c0_118 = arith.constant 0 : index
      %220 = vector.load %arg6[%c0_117, %c0_118] : memref<16x128xf32, #tpu.memory_space<vmem>>, vector<16x128xf32>
      tpu.vector_store %arg6[%c0_117, %c0_118], %219 {strides = array<i32>} : memref<16x128xf32, #tpu.memory_space<vmem>>, vector<16x128xf32>,
    } else {
    }
    %c0 = arith.constant 0 : index
    %c0_1 = arith.constant 0 : index
    %3 = vector.load %arg1[%c0, %c0_1] : memref<8x128xf32, #tpu.memory_space<vmem>>, vector<8x128xf32>
    %c0_2 = arith.constant 0 : index
    %c0_3 = arith.constant 0 : index
    %4 = vector.load %arg2[%c0_2, %c0_3] : memref<8x128xf32, #tpu.memory_space<vmem>>, vector<8x128xf32>
    %c0_4 = arith.constant 0 : index
    %c0_5 = arith.constant 0 : index
    %5 = vector.load %arg3[%c0_4, %c0_5] : memref<8x128xf32, #tpu.memory_space<vmem>>, vector<8x128xf32>
    %cst = arith.constant 0.000000e+00 : f32
    %6 = vector.broadcast %cst : f32 to vector<8x128xf32>
    %7 = arith.maximumf %3, %6 : vector<8x128xf32>
    %8 = arith.mulf %3, %4 : vector<8x128xf32>
    %9 = arith.subf %7, %8 : vector<8x128xf32>
    %10 = math.absf %3 : vector<8x128xf32>
    %cst_6 = arith.constant 0.000000e+00 : f32
    %11 = vector.broadcast %cst_6 : f32 to vector<8x128xf32>
    %12 = arith.subf %11, %10 : vector<8x128xf32>
    %13 = math.exp %12 : vector<8x128xf32>
    %14 = math.log1p %13 : vector<8x128xf32>
    %15 = arith.addf %9, %14 : vector<8x128xf32>
    %16 = arith.negf %3 : vector<8x128xf32>
    %17 = math.exp %16 : vector<8x128xf32>
    %cst_7 = arith.constant 1.000000e+00 : f32
    %18 = vector.broadcast %cst_7 : f32 to vector<8x128xf32>
    %19 = arith.addf %18, %17 : vector<8x128xf32>
    %20 = arith.divf %18, %19 : vector<8x128xf32>
    %21 = arith.subf %20, %4 : vector<8x128xf32>
    %22 = math.absf %21 : vector<8x128xf32>
    %cst_8 = arith.constant 0.000000e+00 : f32
    %23 = vector.broadcast %cst_8 : f32 to vector<8x128xf32>
    %24 = arith.cmpf ogt, %5, %23 : vector<8x128xf32>
    %c0_i32_9 = arith.constant 0 : i32
    %25 = vector.broadcast %c0_i32_9 : i32 to vector<8x128xi32>
    %cst_10 = arith.constant 1.000000e-01 : f32
    %26 = vector.broadcast %cst_10 : f32 to vector<8x128xf32>
    %27 = arith.cmpf oge, %22, %26 : vector<8x128xf32>
    %28 = arith.extui %27 : vector<8x128xi1> to vector<8x128xi32>
    %29 = arith.addi %25, %28 : vector<8x128xi32>
    %cst_11 = arith.constant 2.000000e-01 : f32
    %30 = vector.broadcast %cst_11 : f32 to vector<8x128xf32>
    %31 = arith.cmpf oge, %22, %30 : vector<8x128xf32>
    %32 = arith.extui %31 : vector<8x128xi1> to vector<8x128xi32>
    %33 = arith.addi %29, %32 : vector<8x128xi32>
    %cst_12 = arith.constant 3.000000e-01 : f32
    %34 = vector.broadcast %cst_12 : f32 to vector<8x128xf32>
    %35 = arith.cmpf oge, %22, %34 : vector<8x128xf32>
    %36 = arith.extui %35 : vector<8x128xi1> to vector<8x128xi32>
    %37 = arith.addi %33, %36 : vector<8x128xi32>
    %cst_13 = arith.constant 4.000000e-01 : f32
    %38 = vector.broadcast %cst_13 : f32 to vector<8x128xf32>
    %39 = arith.cmpf oge, %22, %38 : vector<8x128xf32>
    %40 = arith.extui %39 : vector<8x128xi1> to vector<8x128xi32>
    %41 = arith.addi %37, %40 : vector<8x128xi32>
    %cst_14 = arith.constant 5.000000e-01 : f32
    %42 = vector.broadcast %cst_14 : f32 to vector<8x128xf32>
    %43 = arith.cmpf oge, %22, %42 : vector<8x128xf32>
    %44 = arith.extui %43 : vector<8x128xi1> to vector<8x128xi32>
    %45 = arith.addi %41, %44 : vector<8x128xi32>
    %cst_15 = arith.constant 6.000000e-01 : f32
    %46 = vector.broadcast %cst_15 : f32 to vector<8x128xf32>
    %47 = arith.cmpf oge, %22, %46 : vector<8x128xf32>
    %48 = arith.extui %47 : vector<8x128xi1> to vector<8x128xi32>
    %49 = arith.addi %45, %48 : vector<8x128xi32>
    %cst_16 = arith.constant 0.699999988 : f32
    %50 = vector.broadcast %cst_16 : f32 to vector<8x128xf32>
    %51 = arith.cmpf oge, %22, %50 : vector<8x128xf32>
    %52 = arith.extui %51 : vector<8x128xi1> to vector<8x128xi32>
    %53 = arith.addi %49, %52 : vector<8x128xi32>
    %cst_17 = arith.constant 8.000000e-01 : f32
    %54 = vector.broadcast %cst_17 : f32 to vector<8x128xf32>
    %55 = arith.cmpf oge, %22, %54 : vector<8x128xf32>
    %56 = arith.extui %55 : vector<8x128xi1> to vector<8x128xi32>
    %57 = arith.addi %53, %56 : vector<8x128xi32>
    %cst_18 = arith.constant 0.899999976 : f32
    %58 = vector.broadcast %cst_18 : f32 to vector<8x128xf32>
    %59 = arith.cmpf oge, %22, %58 : vector<8x128xf32>
    %60 = arith.extui %59 : vector<8x128xi1> to vector<8x128xi32>
    %61 = arith.addi %57, %60 : vector<8x128xi32>
    %c10_i32 = arith.constant 10 : i32
    %62 = vector.broadcast %c10_i32 : i32 to vector<8x128xi32>
    %63 = arith.select %24, %61, %62 : vector<8x128xi1>, vector<8x128xi32>
    %c0_i32_19 = arith.constant 0 : i32
    %64 = vector.broadcast %c0_i32_19 : i32 to vector<8x128xi32>
    %65 = arith.cmpi eq, %63, %64 : vector<8x128xi32>
    %66 = arith.extui %65 : vector<8x128xi1> to vector<8x128xi32>
    %67 = arith.sitofp %66 : vector<8x128xi32> to vector<8x128xf32>
    %c0_20 = arith.constant 0 : index
    %c0_21 = arith.constant 0 : index
    %68 = vector.load %arg6[%c0_20, %c0_21] : memref<16x128xf32, #tpu.memory_space<vmem>>, vector<1x128xf32>
    %cst_22 = arith.constant dense<0.000000e+00> : vector<128xf32>
    %69 = vector.multi_reduction <add>, %67, %cst_22 [0] : vector<8x128xf32> to vector<128xf32>
    %70 = vector.shape_cast %69 : vector<128xf32> to vector<1x128xf32>
    %71 = arith.addf %68, %70 : vector<1x128xf32>
    %c0_23 = arith.constant 0 : index
    %c0_24 = arith.constant 0 : index
    %72 = vector.load %arg6[%c0_23, %c0_24] : memref<16x128xf32, #tpu.memory_space<vmem>>, vector<1x128xf32>
    tpu.vector_store %arg6[%c0_23, %c0_24], %71 {strides = array<i32>} : memref<16x128xf32, #tpu.memory_space<vmem>>, vector<1x128xf32>,
    %c0_25 = arith.constant 0 : index
    %c0_26 = arith.constant 0 : index
    %73 = vector.load %arg5[%c0_25, %c0_26] : memref<16x128xf32, #tpu.memory_space<vmem>>, vector<1x128xf32>
    %74 = arith.mulf %15, %67 : vector<8x128xf32>
    %cst_27 = arith.constant dense<0.000000e+00> : vector<128xf32>
    %75 = vector.multi_reduction <add>, %74, %cst_27 [0] : vector<8x128xf32> to vector<128xf32>
    %76 = vector.shape_cast %75 : vector<128xf32> to vector<1x128xf32>
    %77 = arith.addf %73, %76 : vector<1x128xf32>
    %c0_28 = arith.constant 0 : index
    %c0_29 = arith.constant 0 : index
    %78 = vector.load %arg5[%c0_28, %c0_29] : memref<16x128xf32, #tpu.memory_space<vmem>>, vector<1x128xf32>
    tpu.vector_store %arg5[%c0_28, %c0_29], %77 {strides = array<i32>} : memref<16x128xf32, #tpu.memory_space<vmem>>, vector<1x128xf32>,
    %c1_i32 = arith.constant 1 : i32
    %79 = vector.broadcast %c1_i32 : i32 to vector<8x128xi32>
    %80 = arith.cmpi eq, %63, %79 : vector<8x128xi32>
    %81 = arith.extui %80 : vector<8x128xi1> to vector<8x128xi32>
    %82 = arith.sitofp %81 : vector<8x128xi32> to vector<8x128xf32>
    %c1 = arith.constant 1 : index
    %c0_30 = arith.constant 0 : index
    %83 = vector.load %arg6[%c1, %c0_30] : memref<16x128xf32, #tpu.memory_space<vmem>>, vector<1x128xf32>
    %cst_31 = arith.constant dense<0.000000e+00> : vector<128xf32>
    %84 = vector.multi_reduction <add>, %82, %cst_31 [0] : vector<8x128xf32> to vector<128xf32>
    %85 = vector.shape_cast %84 : vector<128xf32> to vector<1x128xf32>
    %86 = arith.addf %83, %85 : vector<1x128xf32>
    %c1_32 = arith.constant 1 : index
    %c0_33 = arith.constant 0 : index
    %87 = vector.load %arg6[%c1_32, %c0_33] : memref<16x128xf32, #tpu.memory_space<vmem>>, vector<1x128xf32>
    tpu.vector_store %arg6[%c1_32, %c0_33], %86 {strides = array<i32>} : memref<16x128xf32, #tpu.memory_space<vmem>>, vector<1x128xf32>,
    %c1_34 = arith.constant 1 : index
    %c0_35 = arith.constant 0 : index
    %88 = vector.load %arg5[%c1_34, %c0_35] : memref<16x128xf32, #tpu.memory_space<vmem>>, vector<1x128xf32>
    %89 = arith.mulf %15, %82 : vector<8x128xf32>
    %cst_36 = arith.constant dense<0.000000e+00> : vector<128xf32>
    %90 = vector.multi_reduction <add>, %89, %cst_36 [0] : vector<8x128xf32> to vector<128xf32>
    %91 = vector.shape_cast %90 : vector<128xf32> to vector<1x128xf32>
    %92 = arith.addf %88, %91 : vector<1x128xf32>
    %c1_37 = arith.constant 1 : index
    %c0_38 = arith.constant 0 : index
    %93 = vector.load %arg5[%c1_37, %c0_38] : memref<16x128xf32, #tpu.memory_space<vmem>>, vector<1x128xf32>
    tpu.vector_store %arg5[%c1_37, %c0_38], %92 {strides = array<i32>} : memref<16x128xf32, #tpu.memory_space<vmem>>, vector<1x128xf32>,
    %c2_i32 = arith.constant 2 : i32
    %94 = vector.broadcast %c2_i32 : i32 to vector<8x128xi32>
    %95 = arith.cmpi eq, %63, %94 : vector<8x128xi32>
    %96 = arith.extui %95 : vector<8x128xi1> to vector<8x128xi32>
    %97 = arith.sitofp %96 : vector<8x128xi32> to vector<8x128xf32>
    %c2 = arith.constant 2 : index
    %c0_39 = arith.constant 0 : index
    %98 = vector.load %arg6[%c2, %c0_39] : memref<16x128xf32, #tpu.memory_space<vmem>>, vector<1x128xf32>
    %cst_40 = arith.constant dense<0.000000e+00> : vector<128xf32>
    %99 = vector.multi_reduction <add>, %97, %cst_40 [0] : vector<8x128xf32> to vector<128xf32>
    %100 = vector.shape_cast %99 : vector<128xf32> to vector<1x128xf32>
    %101 = arith.addf %98, %100 : vector<1x128xf32>
    %c2_41 = arith.constant 2 : index
    %c0_42 = arith.constant 0 : index
    %102 = vector.load %arg6[%c2_41, %c0_42] : memref<16x128xf32, #tpu.memory_space<vmem>>, vector<1x128xf32>
    tpu.vector_store %arg6[%c2_41, %c0_42], %101 {strides = array<i32>} : memref<16x128xf32, #tpu.memory_space<vmem>>, vector<1x128xf32>,
    %c2_43 = arith.constant 2 : index
    %c0_44 = arith.constant 0 : index
    %103 = vector.load %arg5[%c2_43, %c0_44] : memref<16x128xf32, #tpu.memory_space<vmem>>, vector<1x128xf32>
    %104 = arith.mulf %15, %97 : vector<8x128xf32>
    %cst_45 = arith.constant dense<0.000000e+00> : vector<128xf32>
    %105 = vector.multi_reduction <add>, %104, %cst_45 [0] : vector<8x128xf32> to vector<128xf32>
    %106 = vector.shape_cast %105 : vector<128xf32> to vector<1x128xf32>
    %107 = arith.addf %103, %106 : vector<1x128xf32>
    %c2_46 = arith.constant 2 : index
    %c0_47 = arith.constant 0 : index
    %108 = vector.load %arg5[%c2_46, %c0_47] : memref<16x128xf32, #tpu.memory_space<vmem>>, vector<1x128xf32>
    tpu.vector_store %arg5[%c2_46, %c0_47], %107 {strides = array<i32>} : memref<16x128xf32, #tpu.memory_space<vmem>>, vector<1x128xf32>,
    %c3_i32 = arith.constant 3 : i32
    %109 = vector.broadcast %c3_i32 : i32 to vector<8x128xi32>
    %110 = arith.cmpi eq, %63, %109 : vector<8x128xi32>
    %111 = arith.extui %110 : vector<8x128xi1> to vector<8x128xi32>
    %112 = arith.sitofp %111 : vector<8x128xi32> to vector<8x128xf32>
    %c3 = arith.constant 3 : index
    %c0_48 = arith.constant 0 : index
    %113 = vector.load %arg6[%c3, %c0_48] : memref<16x128xf32, #tpu.memory_space<vmem>>, vector<1x128xf32>
    %cst_49 = arith.constant dense<0.000000e+00> : vector<128xf32>
    %114 = vector.multi_reduction <add>, %112, %cst_49 [0] : vector<8x128xf32> to vector<128xf32>
    %115 = vector.shape_cast %114 : vector<128xf32> to vector<1x128xf32>
    %116 = arith.addf %113, %115 : vector<1x128xf32>
    %c3_50 = arith.constant 3 : index
    %c0_51 = arith.constant 0 : index
    %117 = vector.load %arg6[%c3_50, %c0_51] : memref<16x128xf32, #tpu.memory_space<vmem>>, vector<1x128xf32>
    tpu.vector_store %arg6[%c3_50, %c0_51], %116 {strides = array<i32>} : memref<16x128xf32, #tpu.memory_space<vmem>>, vector<1x128xf32>,
    %c3_52 = arith.constant 3 : index
    %c0_53 = arith.constant 0 : index
    %118 = vector.load %arg5[%c3_52, %c0_53] : memref<16x128xf32, #tpu.memory_space<vmem>>, vector<1x128xf32>
    %119 = arith.mulf %15, %112 : vector<8x128xf32>
    %cst_54 = arith.constant dense<0.000000e+00> : vector<128xf32>
    %120 = vector.multi_reduction <add>, %119, %cst_54 [0] : vector<8x128xf32> to vector<128xf32>
    %121 = vector.shape_cast %120 : vector<128xf32> to vector<1x128xf32>
    %122 = arith.addf %118, %121 : vector<1x128xf32>
    %c3_55 = arith.constant 3 : index
    %c0_56 = arith.constant 0 : index
    %123 = vector.load %arg5[%c3_55, %c0_56] : memref<16x128xf32, #tpu.memory_space<vmem>>, vector<1x128xf32>
    tpu.vector_store %arg5[%c3_55, %c0_56], %122 {strides = array<i32>} : memref<16x128xf32, #tpu.memory_space<vmem>>, vector<1x128xf32>,
    %c4_i32 = arith.constant 4 : i32
    %124 = vector.broadcast %c4_i32 : i32 to vector<8x128xi32>
    %125 = arith.cmpi eq, %63, %124 : vector<8x128xi32>
    %126 = arith.extui %125 : vector<8x128xi1> to vector<8x128xi32>
    %127 = arith.sitofp %126 : vector<8x128xi32> to vector<8x128xf32>
    %c4 = arith.constant 4 : index
    %c0_57 = arith.constant 0 : index
    %128 = vector.load %arg6[%c4, %c0_57] : memref<16x128xf32, #tpu.memory_space<vmem>>, vector<1x128xf32>
    %cst_58 = arith.constant dense<0.000000e+00> : vector<128xf32>
    %129 = vector.multi_reduction <add>, %127, %cst_58 [0] : vector<8x128xf32> to vector<128xf32>
    %130 = vector.shape_cast %129 : vector<128xf32> to vector<1x128xf32>
    %131 = arith.addf %128, %130 : vector<1x128xf32>
    %c4_59 = arith.constant 4 : index
    %c0_60 = arith.constant 0 : index
    %132 = vector.load %arg6[%c4_59, %c0_60] : memref<16x128xf32, #tpu.memory_space<vmem>>, vector<1x128xf32>
    tpu.vector_store %arg6[%c4_59, %c0_60], %131 {strides = array<i32>} : memref<16x128xf32, #tpu.memory_space<vmem>>, vector<1x128xf32>,
    %c4_61 = arith.constant 4 : index
    %c0_62 = arith.constant 0 : index
    %133 = vector.load %arg5[%c4_61, %c0_62] : memref<16x128xf32, #tpu.memory_space<vmem>>, vector<1x128xf32>
    %134 = arith.mulf %15, %127 : vector<8x128xf32>
    %cst_63 = arith.constant dense<0.000000e+00> : vector<128xf32>
    %135 = vector.multi_reduction <add>, %134, %cst_63 [0] : vector<8x128xf32> to vector<128xf32>
    %136 = vector.shape_cast %135 : vector<128xf32> to vector<1x128xf32>
    %137 = arith.addf %133, %136 : vector<1x128xf32>
    %c4_64 = arith.constant 4 : index
    %c0_65 = arith.constant 0 : index
    %138 = vector.load %arg5[%c4_64, %c0_65] : memref<16x128xf32, #tpu.memory_space<vmem>>, vector<1x128xf32>
    tpu.vector_store %arg5[%c4_64, %c0_65], %137 {strides = array<i32>} : memref<16x128xf32, #tpu.memory_space<vmem>>, vector<1x128xf32>,
    %c5_i32 = arith.constant 5 : i32
    %139 = vector.broadcast %c5_i32 : i32 to vector<8x128xi32>
    %140 = arith.cmpi eq, %63, %139 : vector<8x128xi32>
    %141 = arith.extui %140 : vector<8x128xi1> to vector<8x128xi32>
    %142 = arith.sitofp %141 : vector<8x128xi32> to vector<8x128xf32>
    %c5 = arith.constant 5 : index
    %c0_66 = arith.constant 0 : index
    %143 = vector.load %arg6[%c5, %c0_66] : memref<16x128xf32, #tpu.memory_space<vmem>>, vector<1x128xf32>
    %cst_67 = arith.constant dense<0.000000e+00> : vector<128xf32>
    %144 = vector.multi_reduction <add>, %142, %cst_67 [0] : vector<8x128xf32> to vector<128xf32>
    %145 = vector.shape_cast %144 : vector<128xf32> to vector<1x128xf32>
    %146 = arith.addf %143, %145 : vector<1x128xf32>
    %c5_68 = arith.constant 5 : index
    %c0_69 = arith.constant 0 : index
    %147 = vector.load %arg6[%c5_68, %c0_69] : memref<16x128xf32, #tpu.memory_space<vmem>>, vector<1x128xf32>
    tpu.vector_store %arg6[%c5_68, %c0_69], %146 {strides = array<i32>} : memref<16x128xf32, #tpu.memory_space<vmem>>, vector<1x128xf32>,
    %c5_70 = arith.constant 5 : index
    %c0_71 = arith.constant 0 : index
    %148 = vector.load %arg5[%c5_70, %c0_71] : memref<16x128xf32, #tpu.memory_space<vmem>>, vector<1x128xf32>
    %149 = arith.mulf %15, %142 : vector<8x128xf32>
    %cst_72 = arith.constant dense<0.000000e+00> : vector<128xf32>
    %150 = vector.multi_reduction <add>, %149, %cst_72 [0] : vector<8x128xf32> to vector<128xf32>
    %151 = vector.shape_cast %150 : vector<128xf32> to vector<1x128xf32>
    %152 = arith.addf %148, %151 : vector<1x128xf32>
    %c5_73 = arith.constant 5 : index
    %c0_74 = arith.constant 0 : index
    %153 = vector.load %arg5[%c5_73, %c0_74] : memref<16x128xf32, #tpu.memory_space<vmem>>, vector<1x128xf32>
    tpu.vector_store %arg5[%c5_73, %c0_74], %152 {strides = array<i32>} : memref<16x128xf32, #tpu.memory_space<vmem>>, vector<1x128xf32>,
    %c6_i32 = arith.constant 6 : i32
    %154 = vector.broadcast %c6_i32 : i32 to vector<8x128xi32>
    %155 = arith.cmpi eq, %63, %154 : vector<8x128xi32>
    %156 = arith.extui %155 : vector<8x128xi1> to vector<8x128xi32>
    %157 = arith.sitofp %156 : vector<8x128xi32> to vector<8x128xf32>
    %c6 = arith.constant 6 : index
    %c0_75 = arith.constant 0 : index
    %158 = vector.load %arg6[%c6, %c0_75] : memref<16x128xf32, #tpu.memory_space<vmem>>, vector<1x128xf32>
    %cst_76 = arith.constant dense<0.000000e+00> : vector<128xf32>
    %159 = vector.multi_reduction <add>, %157, %cst_76 [0] : vector<8x128xf32> to vector<128xf32>
    %160 = vector.shape_cast %159 : vector<128xf32> to vector<1x128xf32>
    %161 = arith.addf %158, %160 : vector<1x128xf32>
    %c6_77 = arith.constant 6 : index
    %c0_78 = arith.constant 0 : index
    %162 = vector.load %arg6[%c6_77, %c0_78] : memref<16x128xf32, #tpu.memory_space<vmem>>, vector<1x128xf32>
    tpu.vector_store %arg6[%c6_77, %c0_78], %161 {strides = array<i32>} : memref<16x128xf32, #tpu.memory_space<vmem>>, vector<1x128xf32>,
    %c6_79 = arith.constant 6 : index
    %c0_80 = arith.constant 0 : index
    %163 = vector.load %arg5[%c6_79, %c0_80] : memref<16x128xf32, #tpu.memory_space<vmem>>, vector<1x128xf32>
    %164 = arith.mulf %15, %157 : vector<8x128xf32>
    %cst_81 = arith.constant dense<0.000000e+00> : vector<128xf32>
    %165 = vector.multi_reduction <add>, %164, %cst_81 [0] : vector<8x128xf32> to vector<128xf32>
    %166 = vector.shape_cast %165 : vector<128xf32> to vector<1x128xf32>
    %167 = arith.addf %163, %166 : vector<1x128xf32>
    %c6_82 = arith.constant 6 : index
    %c0_83 = arith.constant 0 : index
    %168 = vector.load %arg5[%c6_82, %c0_83] : memref<16x128xf32, #tpu.memory_space<vmem>>, vector<1x128xf32>
    tpu.vector_store %arg5[%c6_82, %c0_83], %167 {strides = array<i32>} : memref<16x128xf32, #tpu.memory_space<vmem>>, vector<1x128xf32>,
    %c7_i32 = arith.constant 7 : i32
    %169 = vector.broadcast %c7_i32 : i32 to vector<8x128xi32>
    %170 = arith.cmpi eq, %63, %169 : vector<8x128xi32>
    %171 = arith.extui %170 : vector<8x128xi1> to vector<8x128xi32>
    %172 = arith.sitofp %171 : vector<8x128xi32> to vector<8x128xf32>
    %c7 = arith.constant 7 : index
    %c0_84 = arith.constant 0 : index
    %173 = vector.load %arg6[%c7, %c0_84] : memref<16x128xf32, #tpu.memory_space<vmem>>, vector<1x128xf32>
    %cst_85 = arith.constant dense<0.000000e+00> : vector<128xf32>
    %174 = vector.multi_reduction <add>, %172, %cst_85 [0] : vector<8x128xf32> to vector<128xf32>
    %175 = vector.shape_cast %174 : vector<128xf32> to vector<1x128xf32>
    %176 = arith.addf %173, %175 : vector<1x128xf32>
    %c7_86 = arith.constant 7 : index
    %c0_87 = arith.constant 0 : index
    %177 = vector.load %arg6[%c7_86, %c0_87] : memref<16x128xf32, #tpu.memory_space<vmem>>, vector<1x128xf32>
    tpu.vector_store %arg6[%c7_86, %c0_87], %176 {strides = array<i32>} : memref<16x128xf32, #tpu.memory_space<vmem>>, vector<1x128xf32>,
    %c7_88 = arith.constant 7 : index
    %c0_89 = arith.constant 0 : index
    %178 = vector.load %arg5[%c7_88, %c0_89] : memref<16x128xf32, #tpu.memory_space<vmem>>, vector<1x128xf32>
    %179 = arith.mulf %15, %172 : vector<8x128xf32>
    %cst_90 = arith.constant dense<0.000000e+00> : vector<128xf32>
    %180 = vector.multi_reduction <add>, %179, %cst_90 [0] : vector<8x128xf32> to vector<128xf32>
    %181 = vector.shape_cast %180 : vector<128xf32> to vector<1x128xf32>
    %182 = arith.addf %178, %181 : vector<1x128xf32>
    %c7_91 = arith.constant 7 : index
    %c0_92 = arith.constant 0 : index
    %183 = vector.load %arg5[%c7_91, %c0_92] : memref<16x128xf32, #tpu.memory_space<vmem>>, vector<1x128xf32>
    tpu.vector_store %arg5[%c7_91, %c0_92], %182 {strides = array<i32>} : memref<16x128xf32, #tpu.memory_space<vmem>>, vector<1x128xf32>,
    %c8_i32 = arith.constant 8 : i32
    %184 = vector.broadcast %c8_i32 : i32 to vector<8x128xi32>
    %185 = arith.cmpi eq, %63, %184 : vector<8x128xi32>
    %186 = arith.extui %185 : vector<8x128xi1> to vector<8x128xi32>
    %187 = arith.sitofp %186 : vector<8x128xi32> to vector<8x128xf32>
    %c8 = arith.constant 8 : index
    %c0_93 = arith.constant 0 : index
    %188 = vector.load %arg6[%c8, %c0_93] : memref<16x128xf32, #tpu.memory_space<vmem>>, vector<1x128xf32>
    %cst_94 = arith.constant dense<0.000000e+00> : vector<128xf32>
    %189 = vector.multi_reduction <add>, %187, %cst_94 [0] : vector<8x128xf32> to vector<128xf32>
    %190 = vector.shape_cast %189 : vector<128xf32> to vector<1x128xf32>
    %191 = arith.addf %188, %190 : vector<1x128xf32>
    %c8_95 = arith.constant 8 : index
    %c0_96 = arith.constant 0 : index
    %192 = vector.load %arg6[%c8_95, %c0_96] : memref<16x128xf32, #tpu.memory_space<vmem>>, vector<1x128xf32>
    tpu.vector_store %arg6[%c8_95, %c0_96], %191 {strides = array<i32>} : memref<16x128xf32, #tpu.memory_space<vmem>>, vector<1x128xf32>,
    %c8_97 = arith.constant 8 : index
    %c0_98 = arith.constant 0 : index
    %193 = vector.load %arg5[%c8_97, %c0_98] : memref<16x128xf32, #tpu.memory_space<vmem>>, vector<1x128xf32>
    %194 = arith.mulf %15, %187 : vector<8x128xf32>
    %cst_99 = arith.constant dense<0.000000e+00> : vector<128xf32>
    %195 = vector.multi_reduction <add>, %194, %cst_99 [0] : vector<8x128xf32> to vector<128xf32>
    %196 = vector.shape_cast %195 : vector<128xf32> to vector<1x128xf32>
    %197 = arith.addf %193, %196 : vector<1x128xf32>
    %c8_100 = arith.constant 8 : index
    %c0_101 = arith.constant 0 : index
    %198 = vector.load %arg5[%c8_100, %c0_101] : memref<16x128xf32, #tpu.memory_space<vmem>>, vector<1x128xf32>
    tpu.vector_store %arg5[%c8_100, %c0_101], %197 {strides = array<i32>} : memref<16x128xf32, #tpu.memory_space<vmem>>, vector<1x128xf32>,
    %c9_i32 = arith.constant 9 : i32
    %199 = vector.broadcast %c9_i32 : i32 to vector<8x128xi32>
    %200 = arith.cmpi eq, %63, %199 : vector<8x128xi32>
    %201 = arith.extui %200 : vector<8x128xi1> to vector<8x128xi32>
    %202 = arith.sitofp %201 : vector<8x128xi32> to vector<8x128xf32>
    %c9 = arith.constant 9 : index
    %c0_102 = arith.constant 0 : index
    %203 = vector.load %arg6[%c9, %c0_102] : memref<16x128xf32, #tpu.memory_space<vmem>>, vector<1x128xf32>
    %cst_103 = arith.constant dense<0.000000e+00> : vector<128xf32>
    %204 = vector.multi_reduction <add>, %202, %cst_103 [0] : vector<8x128xf32> to vector<128xf32>
    %205 = vector.shape_cast %204 : vector<128xf32> to vector<1x128xf32>
    %206 = arith.addf %203, %205 : vector<1x128xf32>
    %c9_104 = arith.constant 9 : index
    %c0_105 = arith.constant 0 : index
    %207 = vector.load %arg6[%c9_104, %c0_105] : memref<16x128xf32, #tpu.memory_space<vmem>>, vector<1x128xf32>
    tpu.vector_store %arg6[%c9_104, %c0_105], %206 {strides = array<i32>} : memref<16x128xf32, #tpu.memory_space<vmem>>, vector<1x128xf32>,
    %c9_106 = arith.constant 9 : index
    %c0_107 = arith.constant 0 : index
    %208 = vector.load %arg5[%c9_106, %c0_107] : memref<16x128xf32, #tpu.memory_space<vmem>>, vector<1x128xf32>
    %209 = arith.mulf %15, %202 : vector<8x128xf32>
    %cst_108 = arith.constant dense<0.000000e+00> : vector<128xf32>
    %210 = vector.multi_reduction <add>, %209, %cst_108 [0] : vector<8x128xf32> to vector<128xf32>
    %211 = vector.shape_cast %210 : vector<128xf32> to vector<1x128xf32>
    %212 = arith.addf %208, %211 : vector<1x128xf32>
    %c9_109 = arith.constant 9 : index
    %c0_110 = arith.constant 0 : index
    %213 = vector.load %arg5[%c9_109, %c0_110] : memref<16x128xf32, #tpu.memory_space<vmem>>, vector<1x128xf32>
    tpu.vector_store %arg5[%c9_109, %c0_110], %212 {strides = array<i32>} : memref<16x128xf32, #tpu.memory_space<vmem>>, vector<1x128xf32>,
    %c0_i32_111 = arith.constant 0 : i32
    %214 = arith.cmpi eq, %arg0, %c0_i32_111 : i32
    %215 = arith.extui %214 : i1 to i32
    %c0_i32_112 = arith.constant 0 : i32
    %216 = arith.cmpi ne, %215, %c0_i32_112 : i32
    scf.if %216 {
      %c0_113 = arith.constant 0 : index
      %c0_114 = arith.constant 0 : index
      %217 = vector.load %arg6[%c0_113, %c0_114] : memref<16x128xf32, #tpu.memory_space<vmem>>, vector<16x128xf32>
      %cst_115 = arith.constant dense<0.000000e+00> : vector<16xf32>
      %218 = vector.multi_reduction <add>, %217, %cst_115 [1] : vector<16x128xf32> to vector<16xf32>
      %219 = vector.shape_cast %218 : vector<16xf32> to vector<16x1xf32>
      %c0_116 = arith.constant 0 : index
      %c0_117 = arith.constant 0 : index
      %220 = vector.load %arg5[%c0_116, %c0_117] : memref<16x128xf32, #tpu.memory_space<vmem>>, vector<16x128xf32>
      %cst_118 = arith.constant dense<0.000000e+00> : vector<16xf32>
      %221 = vector.multi_reduction <add>, %220, %cst_118 [1] : vector<16x128xf32> to vector<16xf32>
      %222 = vector.shape_cast %221 : vector<16xf32> to vector<16x1xf32>
      %cst_119 = arith.constant 0.000000e+00 : f32
      %223 = vector.broadcast %cst_119 : f32 to vector<16x1xf32>
      %224 = arith.cmpf ogt, %219, %223 : vector<16x1xf32>
      %225 = arith.extui %224 : vector<16x1xi1> to vector<16x1xi32>
      %226 = arith.sitofp %225 : vector<16x1xi32> to vector<16x1xf32>
      %227 = vector.shape_cast %226 : vector<16x1xf32> to vector<1x16x1xf32>
      %cst_120 = arith.constant dense<0.000000e+00> : vector<1xf32>
      %228 = vector.multi_reduction <add>, %227, %cst_120 [1, 2] : vector<1x16x1xf32> to vector<1xf32>
      %229 = vector.shape_cast %228 : vector<1xf32> to vector<1x1x1xf32>
      %230 = vector.extract %229[0, 0, 0] : f32 from vector<1x1x1xf32>
      %231 = vector.broadcast %230 : f32 to vector<1x1xf32>
      %cst_121 = arith.constant 0.000000e+00 : f32
      %232 = vector.broadcast %cst_121 : f32 to vector<16x1xf32>
      %233 = arith.cmpf ogt, %219, %232 : vector<16x1xf32>
      %cst_122 = arith.constant 1.000000e+00 : f32
      %234 = vector.broadcast %cst_122 : f32 to vector<16x1xf32>
      %235 = arith.maximumf %219, %234 : vector<16x1xf32>
      %236 = arith.divf %222, %235 : vector<16x1xf32>
      %cst_123 = arith.constant 0.000000e+00 : f32
      %237 = vector.broadcast %cst_123 : f32 to vector<16x1xf32>
      %238 = arith.select %233, %236, %237 : vector<16x1xi1>, vector<16x1xf32>
      %239 = vector.shape_cast %238 : vector<16x1xf32> to vector<1x16x1xf32>
      %cst_124 = arith.constant dense<0.000000e+00> : vector<1xf32>
      %240 = vector.multi_reduction <add>, %239, %cst_124 [1, 2] : vector<1x16x1xf32> to vector<1xf32>
      %241 = vector.shape_cast %240 : vector<1xf32> to vector<1x1x1xf32>
      %242 = vector.extract %241[0, 0, 0] : f32 from vector<1x1x1xf32>
      %243 = vector.broadcast %242 : f32 to vector<1x1xf32>
      %cst_125 = arith.constant 1.000000e+00 : f32
      %244 = vector.broadcast %cst_125 : f32 to vector<1x1xf32>
      %245 = arith.maximumf %231, %244 : vector<1x1xf32>
      %246 = arith.divf %243, %245 : vector<1x1xf32>
      %c0_126 = arith.constant 0 : index
      %c0_127 = arith.constant 0 : index
      %247 = vector.load %arg4[%c0_126, %c0_127] : memref<1x1xf32, #tpu.memory_space<vmem>>, vector<1x1xf32>
      tpu.vector_store %arg4[%c0_126, %c0_127], %246 {strides = array<i32>} : memref<1x1xf32, #tpu.memory_space<vmem>>, vector<1x1xf32>,
    } else {
    }
    return
  }
  func.func @transform_0(%arg0: i32) -> (i32, i32) {
    %c0_i32 = arith.constant 0 : i32
    %c0_i32_0 = arith.constant 0 : i32
    return %arg0, %c0_i32 : i32, i32
  }
  func.func @transform_1(%arg0: i32) -> (i32, i32) {
    %c0_i32 = arith.constant 0 : i32
    %c0_i32_0 = arith.constant 0 : i32
    return %arg0, %c0_i32 : i32, i32
  }
  func.func @transform_2(%arg0: i32) -> (i32, i32) {
    %c0_i32 = arith.constant 0 : i32
    %c0_i32_0 = arith.constant 0 : i32
    return %arg0, %c0_i32 : i32, i32
  }
  func.func @transform_3(%arg0: i32) -> (i32, i32) {
    %c0_i32 = arith.constant 0 : i32
    %c0_i32_0 = arith.constant 0 : i32
    %c0_i32_1 = arith.constant 0 : i32
    return %c0_i32, %c0_i32_0 : i32, i32
  }
}

</mosaic_0001>

<llo_original>
// kernel: tpu_custom_call.1
$region0: #{tpu_custom_call.1}
  #allocation0 [shape = 'u32[]', space=smem, size = 0x4, offset = 0x4, fixed_abs, tag = 'smem constant byte address 0x4 - core index']
  #allocation1 [shape = 'u32[144,128]{1,0:T(1,128)}', space=vmem, size = 0x12000, scoped, tag = 'internal scratch']
  #allocation2 [shape = 'f32[16,128]{1,0:T(8,128)}', space=vmem, size = 0x2000, scoped, tag = 'scratch operand']
  #allocation3 [shape = 'f32[16,128]{1,0:T(8,128)}', space=vmem, size = 0x2000, scoped, tag = 'scratch operand']
  %s0 = inlined_call_operand.hbm [shape: f32[8,128], index: 0, kind: input, shape index: {}]
  %s1 = inlined_call_operand.hbm [shape: f32[8,128], index: 1, kind: input, shape index: {}]
  %s2 = inlined_call_operand.hbm [shape: f32[8,128], index: 2, kind: input, shape index: {}]
  %s3 = inlined_call_operand.hbm [shape: f32[1,1], index: 3, kind: output, shape index: {}]
  %s4 = sld [smem:[#allocation0]]
  $region42: #{tpu_custom_call.1} parent=0
    _
  %s6 = ssub.s32 1, %s4
  %s7 = scalar_select 0, %s6, %s4
  $region1: #{tpu_custom_call.1} parent=0
    #allocation4 [shape = 'u8[4096]{0}', space=vmem, size = 0x1000, scoped, tag = 'input window, operand 0, single buffered']
    #allocation5 [shape = 's32[1]{0}', space=sflag, size = 0x4, scoped, tag = 'scoped memory for tpu_custom_call.1']
    #allocation6 [shape = 's32[1]{0}', space=sflag, size = 0x4, scoped, tag = 'scoped memory for tpu_custom_call.1']
    #allocation7 [shape = 'u8[4096]{0}', space=vmem, size = 0x1000, scoped, tag = 'input window, operand 1, single buffered']
    #allocation8 [shape = 's32[1]{0}', space=sflag, size = 0x4, scoped, tag = 'scoped memory for tpu_custom_call.1']
    #allocation9 [shape = 'u8[4096]{0}', space=vmem, size = 0x1000, scoped, tag = 'input window, operand 2, single buffered']
    #allocation10 [shape = 'u8[512]{0}', space=vmem, size = 0x400, scoped, tag = 'output window, operand 0, single buffered']
    %8 = vsyncpa [#allocation5], 0
    %9 = vsyncpa [#allocation8], 0
    %10 = vsyncpa [#allocation6], 0
    // Predicated region
    $region2: #{tpu_custom_call.1} parent=1 // pred_check
      _
    $region3: #{tpu_custom_call.1} parent=1 // pred_check_branch
      %12 = sbr.rel (0) target = $region5
    $region4: #{tpu_custom_call.1} parent=1 // pred_region
      %s14 = ssub.s32 128, 128
      %15 = vsyncadd [#allocation5], %s14
      %s17 = sshll.u32 [#allocation4], 4
      %s18 = int_to_ptr.vmem [resolvable:$true] %s17
      %20 = dma.hbm_to_vmem [thread:$0]  %s0, 128, %s18, [#allocation5]
    $region5: #{tpu_custom_call.1} parent=1 // pred_fallthru
      _
    // Predicated region
    $region6: #{tpu_custom_call.1} parent=1 // pred_check
      _
    $region7: #{tpu_custom_call.1} parent=1 // pred_check_branch
      %22 = sbr.rel (0) target = $region9
    $region8: #{tpu_custom_call.1} parent=1 // pred_region
      %s24 = ssub.s32 128, 128
      %25 = vsyncadd [#allocation8], %s24
      %s27 = sshll.u32 [#allocation7], 4
      %s28 = int_to_ptr.vmem [resolvable:$true] %s27
      %30 = dma.hbm_to_vmem [thread:$0]  %s1, 128, %s28, [#allocation8]
    $region9: #{tpu_custom_call.1} parent=1 // pred_fallthru
      _
    // Predicated region
    $region10: #{tpu_custom_call.1} parent=1 // pred_check
      _
    $region11: #{tpu_custom_call.1} parent=1 // pred_check_branch
      %32 = sbr.rel (0) target = $region13
    $region12: #{tpu_custom_call.1} parent=1 // pred_region
      %s34 = ssub.s32 128, 128
      %35 = vsyncadd [#allocation8], %s34
      %s37 = sshll.u32 [#allocation9], 4
      %s38 = int_to_ptr.vmem [resolvable:$true] %s37
      %40 = dma.hbm_to_vmem [thread:$0]  %s2, 128, %s38, [#allocation8]
    $region13: #{tpu_custom_call.1} parent=1 // pred_fallthru
      _
    // Predicated region
    $region14: #{tpu_custom_call.1} parent=1 // pred_check
      _
    $region15: #{tpu_custom_call.1} parent=1 // pred_check_branch
      %42 = sbr.rel (0) target = $region17
    $region16: #{tpu_custom_call.1} parent=1 // pred_region
      %43 = dma.done [#allocation5], 128
    $region17: #{tpu_custom_call.1} parent=1 // pred_fallthru
      _
    // Predicated region
    $region18: #{tpu_custom_call.1} parent=1 // pred_check
      _
    $region19: #{tpu_custom_call.1} parent=1 // pred_check_branch
      %45 = sbr.rel (0) target = $region21
    $region20: #{tpu_custom_call.1} parent=1 // pred_region
      %46 = dma.done [#allocation8], 128
    $region21: #{tpu_custom_call.1} parent=1 // pred_fallthru
      _
    // Predicated region
    $region22: #{tpu_custom_call.1} parent=1 // pred_check
      _
    $region23: #{tpu_custom_call.1} parent=1 // pred_check_branch
      %48 = sbr.rel (0) target = $region25
    $region24: #{tpu_custom_call.1} parent=1 // pred_region
      %49 = dma.done [#allocation8], 128
    $region25: #{tpu_custom_call.1} parent=1 // pred_fallthru
      _
    %p50 = scmp.eq.s32.totalorder 0, 0
    // Predicated region
    $region26: #{tpu_custom_call.1} parent=1 // pred_check
      %p51 = pneg %p50
    $region27: #{tpu_custom_call.1} parent=1 // pred_check_branch
      %53 = sbr.rel (%p51) target = $region29
    $region28: #{tpu_custom_call.1} parent=1 // pred_region
      %54 = vst [vmem:[#allocation2] sm:$0xff] 0.0
      %55 = vst [vmem:[#allocation2 + $0x8] sm:$0xff] 0.0
      %56 = vst [vmem:[#allocation3] sm:$0xff] 0.0
      %57 = vst [vmem:[#allocation3 + $0x8] sm:$0xff] 0.0
    $region29: #{tpu_custom_call.1} parent=1 // pred_fallthru
      _
    %v58 = vld [vmem:[#allocation4] sm:$0xff]
    %v59 = vld [vmem:[#allocation7] sm:$0xff]
    %v60 = vld [vmem:[#allocation9] sm:$0xff]
    %v61 = vmax.f32 %v58, 0.0
    %v62 = vmul.f32 %v58, %v59
    %v63 = vsub.f32 %v61, %v62
    %v64 = vand.u32 2147483647, %v58
    %v65 = vsub.f32 0.0, %v64
    %v66 = vmul.f32 %v65, 1.442695
    %v67 = vpow.pop %v66
    %v68 = vadd.f32 %v67, 1.0
    %v69 = vlog2.pop %v68
    %v70 = vmul.f32 %v69, 0.6931472
    %v71 = vmul.f32 -0.5, %v67
    %v72 = vadd.f32 %v71, 1.0
    %v73 = vmul.f32 %v72, %v67
    %v74 = vand.u32 2147483647, %v67
    %vm75 = vcmp.lt.f32.partialorder %v74, 0.0004427343
    %v76 = vsel %vm75, %v73, %v70
    %v77 = vadd.f32 %v63, %v76
    %v78 = vxor.u32 %v58, 2147483648
    %v79 = vmul.f32 %v78, 1.442695
    %v80 = vpow.pop %v79
    %v81 = vadd.f32 %v80, 1.0
    %v82 = vrcp.pop %v81
    %v83 = vmul.f32 1.0, %v82
    %v84 = vsub.f32 %v83, %v59
    %v85 = vand.u32 2147483647, %v84
    %vm86 = vcmp.gt.f32.partialorder %v60, 0.0
    %vm87 = vcmp.ge.f32.partialorder %v85, 0.1
    %v88 = vsel %vm87, 1, 0
    %vm89 = vcmp.ge.f32.partialorder %v85, 0.2
    %v90 = vsel %vm89, 1, 0
    %v91 = vadd.s32 %v88, %v90
    %vm92 = vcmp.ge.f32.partialorder %v85, 0.3
    %v93 = vsel %vm92, 1, 0
    %v94 = vadd.s32 %v91, %v93
    %vm95 = vcmp.ge.f32.partialorder %v85, 0.4
    %v96 = vsel %vm95, 1, 0
    %v97 = vadd.s32 %v94, %v96
    %vm98 = vcmp.ge.f32.partialorder %v85, 0.5
    %v99 = vsel %vm98, 1, 0
    %v100 = vadd.s32 %v97, %v99
    %vm101 = vcmp.ge.f32.partialorder %v85, 0.6
    %v102 = vsel %vm101, 1, 0
    %v103 = vadd.s32 %v100, %v102
    %vm104 = vcmp.ge.f32.partialorder %v85, 0.7
    %v105 = vsel %vm104, 1, 0
    %v106 = vadd.s32 %v103, %v105
    %vm107 = vcmp.ge.f32.partialorder %v85, 0.8
    %v108 = vsel %vm107, 1, 0
    %v109 = vadd.s32 %v106, %v108
    %vm110 = vcmp.ge.f32.partialorder %v85, 0.9
    %v111 = vsel %vm110, 1, 0
    %v112 = vadd.s32 %v109, %v111
    %v113 = vsel %vm86, %v112, 10
    %vm114 = vcmp.eq.s32.totalorder %v113, 0
    %v115 = vsel %vm114, 1, 0
    %v116 = vcvt.s32.f32 %v115
    %v117 = vld [vmem:[#allocation3] sm:$0x1]
    %v118 = vrot.slane %v116, 4
    %v119 = vadd.f32 %v116, %v118
    %v120 = vrot.slane %v119, 2
    %v121 = vadd.f32 %v119, %v120
    %v122 = vrot.slane %v121, 1
    %v123 = vadd.f32 %v121, %v122
    %v124 = vadd.f32 %v117, %v123
    %125 = vst [vmem:[#allocation3] sm:$0x1] %v124
    %v126 = vld [vmem:[#allocation2] sm:$0x1]
    %v127 = vmul.f32 %v77, %v116
    %v128 = vrot.slane %v127, 4
    %v129 = vadd.f32 %v127, %v128
    %v130 = vrot.slane %v129, 2
    %v131 = vadd.f32 %v129, %v130
    %v132 = vrot.slane %v131, 1
    %v133 = vadd.f32 %v131, %v132
    %v134 = vadd.f32 %v126, %v133
    %135 = vst [vmem:[#allocation2] sm:$0x1] %v134
    %vm136 = vcmp.eq.s32.totalorder %v113, 1
    %v137 = vsel %vm136, 1, 0
    %v138 = vcvt.s32.f32 %v137
    %v139 = vld [vmem:[#allocation3 + $0x1] sm:$0x1]
    %v140 = vrot.slane %v138, 4
    %v141 = vadd.f32 %v138, %v140
    %v142 = vrot.slane %v141, 2
    %v143 = vadd.f32 %v141, %v142
    %v144 = vrot.slane %v143, 1
    %v145 = vadd.f32 %v143, %v144
    %v146 = vadd.f32 %v139, %v145
    %147 = vst [vmem:[#allocation3 + $0x1] sm:$0x1] %v146
    %v148 = vld [vmem:[#allocation2 + $0x1] sm:$0x1]
    %v149 = vmul.f32 %v77, %v138
    %v150 = vrot.slane %v149, 4
    %v151 = vadd.f32 %v149, %v150
    %v152 = vrot.slane %v151, 2
    %v153 = vadd.f32 %v151, %v152
    %v154 = vrot.slane %v153, 1
    %v155 = vadd.f32 %v153, %v154
    %v156 = vadd.f32 %v148, %v155
    %157 = vst [vmem:[#allocation2 + $0x1] sm:$0x1] %v156
    %vm158 = vcmp.eq.s32.totalorder %v113, 2
    %v159 = vsel %vm158, 1, 0
    %v160 = vcvt.s32.f32 %v159
    %v161 = vld [vmem:[#allocation3 + $0x2] sm:$0x1]
    %v162 = vrot.slane %v160, 4
    %v163 = vadd.f32 %v160, %v162
    %v164 = vrot.slane %v163, 2
    %v165 = vadd.f32 %v163, %v164
    %v166 = vrot.slane %v165, 1
    %v167 = vadd.f32 %v165, %v166
    %v168 = vadd.f32 %v161, %v167
    %169 = vst [vmem:[#allocation3 + $0x2] sm:$0x1] %v168
    %v170 = vld [vmem:[#allocation2 + $0x2] sm:$0x1]
    %v171 = vmul.f32 %v77, %v160
    %v172 = vrot.slane %v171, 4
    %v173 = vadd.f32 %v171, %v172
    %v174 = vrot.slane %v173, 2
    %v175 = vadd.f32 %v173, %v174
    %v176 = vrot.slane %v175, 1
    %v177 = vadd.f32 %v175, %v176
    %v178 = vadd.f32 %v170, %v177
    %179 = vst [vmem:[#allocation2 + $0x2] sm:$0x1] %v178
    %vm180 = vcmp.eq.s32.totalorder %v113, 3
    %v181 = vsel %vm180, 1, 0
    %v182 = vcvt.s32.f32 %v181
    %v183 = vld [vmem:[#allocation3 + $0x3] sm:$0x1]
    %v184 = vrot.slane %v182, 4
    %v185 = vadd.f32 %v182, %v184
    %v186 = vrot.slane %v185, 2
    %v187 = vadd.f32 %v185, %v186
    %v188 = vrot.slane %v187, 1
    %v189 = vadd.f32 %v187, %v188
    %v190 = vadd.f32 %v183, %v189
    %191 = vst [vmem:[#allocation3 + $0x3] sm:$0x1] %v190
    %v192 = vld [vmem:[#allocation2 + $0x3] sm:$0x1]
    %v193 = vmul.f32 %v77, %v182
    %v194 = vrot.slane %v193, 4
    %v195 = vadd.f32 %v193, %v194
    %v196 = vrot.slane %v195, 2
    %v197 = vadd.f32 %v195, %v196
    %v198 = vrot.slane %v197, 1
    %v199 = vadd.f32 %v197, %v198
    %v200 = vadd.f32 %v192, %v199
    %201 = vst [vmem:[#allocation2 + $0x3] sm:$0x1] %v200
    %vm202 = vcmp.eq.s32.totalorder %v113, 4
    %v203 = vsel %vm202, 1, 0
    %v204 = vcvt.s32.f32 %v203
    %v205 = vld [vmem:[#allocation3 + $0x4] sm:$0x1]
    %v206 = vrot.slane %v204, 4
    %v207 = vadd.f32 %v204, %v206
    %v208 = vrot.slane %v207, 2
    %v209 = vadd.f32 %v207, %v208
    %v210 = vrot.slane %v209, 1
    %v211 = vadd.f32 %v209, %v210
    %v212 = vadd.f32 %v205, %v211
    %213 = vst [vmem:[#allocation3 + $0x4] sm:$0x1] %v212
    %v214 = vld [vmem:[#allocation2 + $0x4] sm:$0x1]
    %v215 = vmul.f32 %v77, %v204
    %v216 = vrot.slane %v215, 4
    %v217 = vadd.f32 %v215, %v216
    %v218 = vrot.slane %v217, 2
    %v219 = vadd.f32 %v217, %v218
    %v220 = vrot.slane %v219, 1
    %v221 = vadd.f32 %v219, %v220
    %v222 = vadd.f32 %v214, %v221
    %223 = vst [vmem:[#allocation2 + $0x4] sm:$0x1] %v222
    %vm224 = vcmp.eq.s32.totalorder %v113, 5
    %v225 = vsel %vm224, 1, 0
    %v226 = vcvt.s32.f32 %v225
    %v227 = vld [vmem:[#allocation3 + $0x5] sm:$0x1]
    %v228 = vrot.slane %v226, 4
    %v229 = vadd.f32 %v226, %v228
    %v230 = vrot.slane %v229, 2
    %v231 = vadd.f32 %v229, %v230
    %v232 = vrot.slane %v231, 1
    %v233 = vadd.f32 %v231, %v232
    %v234 = vadd.f32 %v227, %v233
    %235 = vst [vmem:[#allocation3 + $0x5] sm:$0x1] %v234
    %v236 = vld [vmem:[#allocation2 + $0x5] sm:$0x1]
    %v237 = vmul.f32 %v77, %v226
    %v238 = vrot.slane %v237, 4
    %v239 = vadd.f32 %v237, %v238
    %v240 = vrot.slane %v239, 2
    %v241 = vadd.f32 %v239, %v240
    %v242 = vrot.slane %v241, 1
    %v243 = vadd.f32 %v241, %v242
    %v244 = vadd.f32 %v236, %v243
    %245 = vst [vmem:[#allocation2 + $0x5] sm:$0x1] %v244
    %vm246 = vcmp.eq.s32.totalorder %v113, 6
    %v247 = vsel %vm246, 1, 0
    %v248 = vcvt.s32.f32 %v247
    %v249 = vld [vmem:[#allocation3 + $0x6] sm:$0x1]
    %v250 = vrot.slane %v248, 4
    %v251 = vadd.f32 %v248, %v250
    %v252 = vrot.slane %v251, 2
    %v253 = vadd.f32 %v251, %v252
    %v254 = vrot.slane %v253, 1
    %v255 = vadd.f32 %v253, %v254
    %v256 = vadd.f32 %v249, %v255
    %257 = vst [vmem:[#allocation3 + $0x6] sm:$0x1] %v256
    %v258 = vld [vmem:[#allocation2 + $0x6] sm:$0x1]
    %v259 = vmul.f32 %v77, %v248
    %v260 = vrot.slane %v259, 4
    %v261 = vadd.f32 %v259, %v260
    %v262 = vrot.slane %v261, 2
    %v263 = vadd.f32 %v261, %v262
    %v264 = vrot.slane %v263, 1
    %v265 = vadd.f32 %v263, %v264
    %v266 = vadd.f32 %v258, %v265
    %267 = vst [vmem:[#allocation2 + $0x6] sm:$0x1] %v266
    %vm268 = vcmp.eq.s32.totalorder %v113, 7
    %v269 = vsel %vm268, 1, 0
    %v270 = vcvt.s32.f32 %v269
    %v271 = vld [vmem:[#allocation3 + $0x7] sm:$0x1]
    %v272 = vrot.slane %v270, 4
    %v273 = vadd.f32 %v270, %v272
    %v274 = vrot.slane %v273, 2
    %v275 = vadd.f32 %v273, %v274
    %v276 = vrot.slane %v275, 1
    %v277 = vadd.f32 %v275, %v276
    %v278 = vadd.f32 %v271, %v277
    %279 = vst [vmem:[#allocation3 + $0x7] sm:$0x1] %v278
    %v280 = vld [vmem:[#allocation2 + $0x7] sm:$0x1]
    %v281 = vmul.f32 %v77, %v270
    %v282 = vrot.slane %v281, 4
    %v283 = vadd.f32 %v281, %v282
    %v284 = vrot.slane %v283, 2
    %v285 = vadd.f32 %v283, %v284
    %v286 = vrot.slane %v285, 1
    %v287 = vadd.f32 %v285, %v286
    %v288 = vadd.f32 %v280, %v287
    %289 = vst [vmem:[#allocation2 + $0x7] sm:$0x1] %v288
    %vm290 = vcmp.eq.s32.totalorder %v113, 8
    %v291 = vsel %vm290, 1, 0
    %v292 = vcvt.s32.f32 %v291
    %v293 = vld [vmem:[#allocation3 + $0x8] sm:$0x1]
    %v294 = vrot.slane %v292, 4
    %v295 = vadd.f32 %v292, %v294
    %v296 = vrot.slane %v295, 2
    %v297 = vadd.f32 %v295, %v296
    %v298 = vrot.slane %v297, 1
    %v299 = vadd.f32 %v297, %v298
    %v300 = vadd.f32 %v293, %v299
    %301 = vst [vmem:[#allocation3 + $0x8] sm:$0x1] %v300
    %v302 = vld [vmem:[#allocation2 + $0x8] sm:$0x1]
    %v303 = vmul.f32 %v77, %v292
    %v304 = vrot.slane %v303, 4
    %v305 = vadd.f32 %v303, %v304
    %v306 = vrot.slane %v305, 2
    %v307 = vadd.f32 %v305, %v306
    %v308 = vrot.slane %v307, 1
    %v309 = vadd.f32 %v307, %v308
    %v310 = vadd.f32 %v302, %v309
    %311 = vst [vmem:[#allocation2 + $0x8] sm:$0x1] %v310
    %vm312 = vcmp.eq.s32.totalorder %v113, 9
    %v313 = vsel %vm312, 1, 0
    %v314 = vcvt.s32.f32 %v313
    %v315 = vld [vmem:[#allocation3 + $0x9] sm:$0x1]
    %v316 = vrot.slane %v314, 4
    %v317 = vadd.f32 %v314, %v316
    %v318 = vrot.slane %v317, 2
    %v319 = vadd.f32 %v317, %v318
    %v320 = vrot.slane %v319, 1
    %v321 = vadd.f32 %v319, %v320
    %v322 = vadd.f32 %v315, %v321
    %323 = vst [vmem:[#allocation3 + $0x9] sm:$0x1] %v322
    %v324 = vld [vmem:[#allocation2 + $0x9] sm:$0x1]
    %v325 = vmul.f32 %v77, %v314
    %v326 = vrot.slane %v325, 4
    %v327 = vadd.f32 %v325, %v326
    %v328 = vrot.slane %v327, 2
    %v329 = vadd.f32 %v327, %v328
    %v330 = vrot.slane %v329, 1
    %v331 = vadd.f32 %v329, %v330
    %v332 = vadd.f32 %v324, %v331
    %333 = vst [vmem:[#allocation2 + $0x9] sm:$0x1] %v332
    // Predicated region
    $region30: #{tpu_custom_call.1} parent=1 // pred_check
      %p334 = pneg %p50
    $region31: #{tpu_custom_call.1} parent=1 // pred_check_branch
      %336 = sbr.rel (%p334) target = $region33
    $region32: #{tpu_custom_call.1} parent=1 // pred_region
      %v337 = vld [vmem:[#allocation3] sm:$0xff]
      %v338 = vld [vmem:[#allocation3 + $0x8] sm:$0xff]
      %339 = vadd.xlane.f32.xlu0 %v337
      %v340 = vpop.xlane.xlu0 %339
      %341 = vadd.xlane.f32.xlu0 %v338
      %v342 = vpop.xlane.xlu0 %341
      %v343 = vld [vmem:[#allocation2] sm:$0xff]
      %v344 = vld [vmem:[#allocation2 + $0x8] sm:$0xff]
      %345 = vadd.xlane.f32.xlu0 %v343
      %v346 = vpop.xlane.xlu0 %345
      %347 = vadd.xlane.f32.xlu0 %v344
      %v348 = vpop.xlane.xlu0 %347
      %vm349 = vcmp.gt.f32.partialorder %v340, 0.0
      %vm350 = vcmp.gt.f32.partialorder %v342, 0.0
      %v351 = vsel %vm349, 1, 0
      %v352 = vsel %vm350, 1, 0
      %v353 = vcvt.s32.f32 %v351
      %v354 = vcvt.s32.f32 %v352
      %vm355 = vcmask 7168
      %v356 = vsel %vm355, %v353, 0.0
      %v357 = vsel %vm355, %v354, 0.0
      %v358 = vadd.f32 %v356, %v357
      %359 = vadd.xlane.f32.xlu0 %v358
      %v360 = vpop.xlane.xlu0 %359
      %v361 = vrot.slane %v360, 4
      %v362 = vadd.f32 %v360, %v361
      %v363 = vrot.slane %v362, 2
      %v364 = vadd.f32 %v362, %v363
      %v365 = vrot.slane %v364, 1
      %v366 = vadd.f32 %v364, %v365
      %s367 = vtos %v366
      %v368 = vstv %s367
      %v369 = vmax.f32 %v340, 1.0
      %v370 = vmax.f32 %v342, 1.0
      %v371 = vrcp.pop %v369
      %v372 = vmul.f32 %v346, %v371
      %v373 = vrcp.pop %v370
      %v374 = vmul.f32 %v348, %v373
      %v375 = vsel %vm349, %v372, 0.0
      %v376 = vsel %vm350, %v374, 0.0
      %v377 = vsel %vm355, %v375, 0.0
      %v378 = vsel %vm355, %v376, 0.0
      %v379 = vadd.f32 %v377, %v378
      %380 = vadd.xlane.f32.xlu0 %v379
      %v381 = vpop.xlane.xlu0 %380
      %v382 = vrot.slane %v381, 4
      %v383 = vadd.f32 %v381, %v382
      %v384 = vrot.slane %v383, 2
      %v385 = vadd.f32 %v383, %v384
      %v386 = vrot.slane %v385, 1
      %v387 = vadd.f32 %v385, %v386
      %s388 = vtos %v387
      %v389 = vstv %s388
      %v390 = vmax.f32 %v368, 1.0
      %v391 = vrcp.pop %v390
      %v392 = vmul.f32 %v389, %v391
      %vm393 = vcmask 0
      %394 = vst.msk [vmem:[#allocation10] sm:$0x1] %vm393, %v392
    $region33: #{tpu_custom_call.1} parent=1 // pred_fallthru
      _
    // Predicated region
    $region34: #{tpu_custom_call.1} parent=1 // pred_check
      _
    $region35: #{tpu_custom_call.1} parent=1 // pred_check_branch
      %396 = sbr.rel (0) target = $region37
    $region36: #{tpu_custom_call.1} parent=1 // pred_region
      %s398 = ssub.s32 16, 16
      %399 = vsyncadd [#allocation6], %s398
      %s401 = sshll.u32 [#allocation10], 4
      %s402 = int_to_ptr.vmem [resolvable:$true] %s401
      %404 = dma.vmem_to_hbm [thread:$0]  %s402, 16, %s3, [#allocation6]
    $region37: #{tpu_custom_call.1} parent=1 // pred_fallthru
      _
    // Predicated region
    $region38: #{tpu_custom_call.1} parent=1 // pred_check
      _
    $region39: #{tpu_custom_call.1} parent=1 // pred_check_branch
      %406 = sbr.rel (0) target = $region41
    $region40: #{tpu_custom_call.1} parent=1 // pred_region
      %407 = dma.done [#allocation6], 16
    $region41: #{tpu_custom_call.1} parent=1 // pred_fallthru
      _
    %408 = vsyncpa [#allocation5], 1
    %409 = vsyncpa [#allocation8], 1
    %410 = vsyncpa [#allocation6], 1

</llo_original>
